<compile_context>
chip_gen: v5e
topology: v5e:2x2
jax: 0.10.0
libtpu: 0.0.40
codegen_flags: <defaults>
</compile_context>

<pallas_src>
import math

import jax
import jax.numpy as jnp
from jax.experimental import pallas as pl
from jax.experimental.pallas import tpu as pltpu


def _pe_add_kernel(x_ref, pe_ref, o_ref):
    # x_ref : (TB, TL) tile of the flattened [B, S*D] activations
    # pe_ref: (1, TL)  matching slice of the flattened PE row (shared by all rows)
    # Single VPU add per vreg; (1, TL) broadcasts over the row (batch) axis.
    o_ref[...] = x_ref[...] + pe_ref[...]


def make_pe_row(d_model: int, seq_len: int, dtype=jnp.float32):
    """Flattened positional-encoding row [1, seq_len * d_model].

    Element (s*d_model + d) equals the PyTorch buffer pe[s, 0, d], so adding this
    row to x.reshape(B, seq_len*d_model) reproduces `x + pe[:seq_len].swapaxes(0, 1)`.
    Cast to the activation dtype once here (avoids per-element converts in-kernel).
    """
    position = jnp.arange(seq_len, dtype=jnp.float32)[:, None]                 # [S, 1]
    div_term = jnp.exp(
        jnp.arange(0, d_model, 2, dtype=jnp.float32) * (-math.log(10000.0) / d_model)
    )                                                                           # [D//2]
    angles = position * div_term                                                # [S, D//2]
    pe = jnp.zeros((seq_len, d_model), jnp.float32)
    pe = pe.at[:, 0::2].set(jnp.sin(angles))
    pe = pe.at[:, 1::2].set(jnp.cos(angles))
    return pe.reshape(1, seq_len * d_model).astype(dtype)                       # [1, S*D]


# ~85% of HBM roofline is already reached at >=~1 MiB blocks; 2 MiB keeps double-buffered
# in + out + PE well inside every generation's VMEM budget (incl. v7x's 64 MiB physical).
_TARGET_BLOCK_BYTES = 2 << 20


def _choose_tiles(num_rows: int, row_len: int, itemsize: int):
    """Pick (row_tile, lane_tile) for the flattened [num_rows, row_len] add.

    Invariants:
      * every block is <= _TARGET_BLOCK_BYTES,
      * lane_tile is the full lane-dense width or a multiple of 128,
      * row_tile is the full row count or a multiple of the sublane pack
        (8 for f32, 16 for bf16, 32 for int8),
      * when blocks must be split, the row axis is split first so output stores stay
        lane-dense full-width (the biggest measured single lever).
    """
    sub = {4: 8, 2: 16, 1: 32}.get(itemsize, 8)
    row_bytes = row_len * itemsize

    # Smallest legal row group: the full batch, or one sublane pack of it.
    min_rows = num_rows if num_rows <= sub else sub

    if min_rows * row_bytes <= _TARGET_BLOCK_BYTES:
        # Full-width (lane-dense) rows fit under the cap: grow the row tile toward it.
        lane_tile = row_len
        row_tile = max(min_rows, (_TARGET_BLOCK_BYTES // row_bytes) // sub * sub)
        row_tile = min(row_tile, num_rows)
        if row_tile < num_rows:
            row_tile = max(sub, (row_tile // sub) * sub)       # keep sublane-aligned
    else:
        # Even the smallest legal row group exceeds the cap: split the lane axis
        # (128-multiples; still >= 64 KiB of lanes in practice -> wide unmasked stores).
        row_tile = min_rows
        lane_tile = max(128, (_TARGET_BLOCK_BYTES // (row_tile * itemsize)) // 128 * 128)
        lane_tile = min(lane_tile, row_len)

    return row_tile, lane_tile


def positional_encoding(x: jax.Array, pe_row: jax.Array) -> jax.Array:
    """x: [batch, seq, d_model]; pe_row: [1, seq*d_model] (from make_pe_row)."""
    B, S, D = x.shape
    L = S * D
    assert pe_row.shape == (1, L), f"pe_row must be [1, {L}], got {pe_row.shape}"

    x2 = x.reshape(B, L)                       # lane-dense 2-D view of the activations
    pe_row = pe_row.astype(x.dtype)            # no-op when built with matching dtype

    TB, TL = _choose_tiles(B, L, x.dtype.itemsize)

    # Grid: lane-block axis outermost, row-block axis innermost.  The PE tile's block
    # index (0, j) is then constant across the inner loop, so Pallas skips re-fetching
    # it every step; activations/outputs change every step regardless.
    grid = (pl.cdiv(L, TL), pl.cdiv(B, TB))

    out2 = pl.pallas_call(
        _pe_add_kernel,
        out_shape=jax.ShapeDtypeStruct((B, L), x.dtype),
        grid_spec=pltpu.PrefetchScalarGridSpec(
            num_scalar_prefetch=0,
            grid=grid,
            in_specs=[
                pl.BlockSpec((TB, TL), lambda j, i: (i, j)),   # activation tile
                pl.BlockSpec((1, TL), lambda j, i: (0, j)),    # PE slice, inner-invariant
            ],
            out_specs=pl.BlockSpec((TB, TL), lambda j, i: (i, j)),
        ),
        compiler_params=pltpu.CompilerParams(
            dimension_semantics=("parallel", "parallel"),
            vmem_limit_bytes=32 << 20,         # deterministic headroom on v5e/v6e/v7x
        ),
        input_output_aliases={0: 0},           # add in place on the activation buffer
    )(x2, pe_row)

    return out2.reshape(B, S, D)


if __name__ == "__main__":
    # Small shapes consistent with the module's forward: [batch, seq, d_model]
    batch, seq, d_model = 2, 8, 32

    key = jax.random.PRNGKey(0)
    x = jax.random.normal(key, (batch, seq, d_model), dtype=jnp.float32)

    pe_row = make_pe_row(d_model, seq, dtype=x.dtype)

    # Reference (pure JAX), identical to x + pe[:seq].swapaxes(0, 1).
    # Computed before the kernel call since the kernel aliases its (reshaped) input.
    ref = x + pe_row.reshape(seq, d_model)[None, :, :]
    ref = jax.block_until_ready(ref)

    out = positional_encoding(x, pe_row)
    out = jax.block_until_ready(out)

    assert out.shape == (batch, seq, d_model)
    assert jnp.allclose(out, ref, atol=1e-6), "mismatch vs reference"

    print("KERNEL_OK")
</pallas_src>

<mosaic_0001>
module attributes {stable_mosaic.version = 11 : i64} {
  func.func @_pe_add_kernel(%arg0: i32, %arg1: i32, %arg2: memref<2x256xf32, #tpu.memory_space<vmem>>, %arg3: memref<1x256xf32, #tpu.memory_space<vmem>>, %arg4: memref<2x256xf32, #tpu.memory_space<vmem>>) attributes {dimension_semantics = [#tpu.dimension_semantics<parallel>, #tpu.dimension_semantics<parallel>], iteration_bounds = array<i64: 1, 1>, scalar_prefetch = 0 : i64, scratch_operands = 0 : i64, tpu.core_type = #tpu.core_type<tc>, window_params = [{transform_indices = @transform_0, window_bounds = array<i64: 2, 256>}, {transform_indices = @transform_1, window_bounds = array<i64: 1, 256>}, {transform_indices = @transform_2, window_bounds = array<i64: 2, 256>}]} {
    %c0 = arith.constant 0 : index
    %c0_0 = arith.constant 0 : index
    %0 = vector.load %arg2[%c0, %c0_0] : memref<2x256xf32, #tpu.memory_space<vmem>>, vector<2x256xf32>
    %c0_1 = arith.constant 0 : index
    %c0_2 = arith.constant 0 : index
    %1 = vector.load %arg3[%c0_1, %c0_2] : memref<1x256xf32, #tpu.memory_space<vmem>>, vector<1x256xf32>
    %2 = vector.broadcast %1 : vector<1x256xf32> to vector<2x256xf32>
    %3 = arith.addf %0, %2 : vector<2x256xf32>
    %c0_3 = arith.constant 0 : index
    %c0_4 = arith.constant 0 : index
    %4 = vector.load %arg4[%c0_3, %c0_4] : memref<2x256xf32, #tpu.memory_space<vmem>>, vector<2x256xf32>
    tpu.vector_store %arg4[%c0_3, %c0_4], %3 {strides = array<i32>} : memref<2x256xf32, #tpu.memory_space<vmem>>, vector<2x256xf32>,
    return
  }
  func.func @transform_0(%arg0: i32, %arg1: i32) -> (i32, i32) {
    %c0_i32 = arith.constant 0 : i32
    return %arg1, %arg0 : i32, i32
  }
  func.func @transform_1(%arg0: i32, %arg1: i32) -> (i32, i32) {
    %c0_i32 = arith.constant 0 : i32
    %c0_i32_0 = arith.constant 0 : i32
    return %c0_i32, %arg0 : i32, i32
  }
  func.func @transform_2(%arg0: i32, %arg1: i32) -> (i32, i32) {
    %c0_i32 = arith.constant 0 : i32
    return %arg1, %arg0 : i32, i32
  }
}

</mosaic_0001>

<llo_original>
// kernel: tpu_custom_call.1
$region0: #{tpu_custom_call.1}
  #allocation0 [shape = 'u32[]', space=smem, size = 0x4, offset = 0x4, fixed_abs, tag = 'smem constant byte address 0x4 - core index']
  #allocation1 [shape = 'u32[72,128]{1,0:T(1,128)}', space=vmem, size = 0x9000, scoped, tag = 'internal scratch']
  %s0 = inlined_call_operand.hbm [shape: f32[2,256], index: 0, kind: input, shape index: {}, may-alias: {0,2}]
  %s1 = inlined_call_operand.vmem [shape: f32[1,256], index: 1, kind: input, shape index: {}]
  %s2 = inlined_call_operand.hbm [shape: f32[2,256], index: 2, kind: output, shape index: {}, may-alias: {0,2}]
  %s3 = sld [smem:[#allocation0]]
  $region22: #{tpu_custom_call.1} parent=0
    _
  %s5 = ssub.s32 1, %s3
  %s6 = scalar_select 0, %s5, %s3
  $region1: #{tpu_custom_call.1} parent=0
    #allocation2 [shape = 'u8[2048]{0}', space=vmem, size = 0x800, scoped, tag = 'input window, operand 0, single buffered']
    #allocation3 [shape = 's32[1]{0}', space=sflag, size = 0x4, scoped, tag = 'scoped memory for tpu_custom_call.1']
    #allocation4 [shape = 's32[1]{0}', space=sflag, size = 0x4, scoped, tag = 'scoped memory for tpu_custom_call.1']
    #allocation5 [shape = 'u8[2048]{0}', space=vmem, size = 0x800, scoped, tag = 'output window, operand 0, single buffered']
    %7 = vsyncpa [#allocation3], 0
    %8 = vsyncpa [#allocation4], 0
    // Predicated region
    $region2: #{tpu_custom_call.1} parent=1 // pred_check
      _
    $region3: #{tpu_custom_call.1} parent=1 // pred_check_branch
      %10 = sbr.rel (0) target = $region5
    $region4: #{tpu_custom_call.1} parent=1 // pred_region
      %12 = vsyncadd [#allocation3], 0
      %s14 = sshll.u32 %s0, 4
      %s15 = int_to_ptr.hbm [resolvable:$true] %s14
      %s16 = sshll.u32 [#allocation2], 4
      %s17 = int_to_ptr.vmem [resolvable:$true] %s16
      %19 = dma.hbm_to_vmem [thread:$0]  %s15, 64, %s17, [#allocation3]
    $region5: #{tpu_custom_call.1} parent=1 // pred_fallthru
      _
    // Predicated region
    $region6: #{tpu_custom_call.1} parent=1 // pred_check
      _
    $region7: #{tpu_custom_call.1} parent=1 // pred_check_branch
      %21 = sbr.rel (0) target = $region9
    $region8: #{tpu_custom_call.1} parent=1 // pred_region
      _
    $region9: #{tpu_custom_call.1} parent=1 // pred_fallthru
      _
    // Predicated region
    $region10: #{tpu_custom_call.1} parent=1 // pred_check
      _
    $region11: #{tpu_custom_call.1} parent=1 // pred_check_branch
      %23 = sbr.rel (0) target = $region13
    $region12: #{tpu_custom_call.1} parent=1 // pred_region
      %25 = dma.done [#allocation3], 64
    $region13: #{tpu_custom_call.1} parent=1 // pred_fallthru
      _
    %v26 = vld [vmem:[#allocation2] sm:$0xf]
    %v27 = vld [vmem:[%s1] sm:$0x3]
    %v29 = vperm.slane %v27, 0
    %v30 = vperm.slane %v27, 1
    %v31 = vrot.slane %v30, 6
    %vm32 = vcmask 1041408
    %v33 = vsel %vm32, %v29, %v31
    %v35 = vadd.f32 %v26, %v33
    %36 = vst [vmem:[#allocation5] sm:$0xf] %v35
    // Predicated region
    $region14: #{tpu_custom_call.1} parent=1 // pred_check
      _
    $region15: #{tpu_custom_call.1} parent=1 // pred_check_branch
      %38 = sbr.rel (0) target = $region17
    $region16: #{tpu_custom_call.1} parent=1 // pred_region
      %40 = vsyncadd [#allocation4], 0
      %s42 = sshll.u32 [#allocation5], 4
      %s43 = int_to_ptr.vmem [resolvable:$true] %s42
      %s44 = sshll.u32 %s2, 4
      %s45 = int_to_ptr.hbm [resolvable:$true] %s44
      %47 = dma.vmem_to_hbm [thread:$0]  %s43, 64, %s45, [#allocation4]
    $region17: #{tpu_custom_call.1} parent=1 // pred_fallthru
      _
    // Predicated region
    $region18: #{tpu_custom_call.1} parent=1 // pred_check
      _
    $region19: #{tpu_custom_call.1} parent=1 // pred_check_branch
      %49 = sbr.rel (0) target = $region21
    $region20: #{tpu_custom_call.1} parent=1 // pred_region
      %51 = dma.done [#allocation4], 64
    $region21: #{tpu_custom_call.1} parent=1 // pred_fallthru
      _
    %52 = vsyncpa [#allocation3], 1
    %53 = vsyncpa [#allocation4], 1

</llo_original>
